<compile_context>
chip_gen: v7x
topology: tpu7x:2x2x1
jax: 0.10.0
libtpu: 0.0.40
codegen_flags: <defaults>
</compile_context>

<pallas_src>
import functools

import jax
import jax.numpy as jnp
from jax.experimental import pallas as pl
from jax.experimental.pallas import tpu as pltpu


def _round_up(n, m):
    return ((n + m - 1) // m) * m


def autoencoder_kernel(
    x_ref,
    w1_ref, w2_ref, w3_ref, w4_ref,
    b_ref,
    encoded_ref, decoded_ref,
    *, in_p, hid_p, bn_p,
):
    # Activation tile for this grid step (bf16), resident weights (bf16),
    # packed biases (f32, one row per layer).
    x = x_ref[...]
    b1 = b_ref[0:1, 0:hid_p]
    b2 = b_ref[1:2, 0:bn_p]
    b3 = b_ref[2:3, 0:hid_p]
    b4 = b_ref[3:4, 0:in_p]

    # input -> hidden, ReLU  (bf16 matmul, f32 accumulate, f32 elementwise)
    h = jnp.dot(x, w1_ref[...], preferred_element_type=jnp.float32) + b1
    h = jnp.maximum(h, 0.0)

    # hidden -> bottleneck (encoded, no activation)
    enc = jnp.dot(h.astype(w2_ref.dtype), w2_ref[...],
                  preferred_element_type=jnp.float32) + b2
    encoded_ref[...] = enc.astype(encoded_ref.dtype)

    # bottleneck -> hidden, ReLU
    h2 = jnp.dot(enc.astype(w3_ref.dtype), w3_ref[...],
                 preferred_element_type=jnp.float32) + b3
    h2 = jnp.maximum(h2, 0.0)

    # hidden -> output (decoded, no activation)
    dec = jnp.dot(h2.astype(w4_ref.dtype), w4_ref[...],
                  preferred_element_type=jnp.float32) + b4
    decoded_ref[...] = dec.astype(decoded_ref.dtype)


def _vmem_estimate_bytes(tb, in_p, hid_p, bn_p, pmax):
    """Rough per-step VMEM working set (double-buffered inputs/outputs)."""
    w_bytes = 2  # bf16 weights
    weights = 2 * w_bytes * (in_p * hid_p + hid_p * bn_p + bn_p * hid_p + hid_p * in_p)
    biases = 2 * 4 * 8 * pmax                       # (4,pmax) f32, padded sublanes
    x_in = 2 * tb * in_p * 2                        # bf16 input tiles
    outs = 2 * tb * (bn_p + in_p) * 4               # f32 output tiles
    inter = 3 * tb * hid_p * 4                      # f32 intermediates (h, enc, h2)
    return weights + biases + x_in + outs + inter


def autoencoder_forward(x, params, *, block_b=512, compute_dtype=jnp.bfloat16):
    """x: (B, input_size) float32. params: dict of (w, b) per layer.

    Weights are (in_features, out_features); biases are (1, out_features).
    Returns dict with 'encoded' (B, bottleneck) and 'decoded' (B, input_size),
    both float32.
    """
    B, in_f = x.shape
    hid = params["w1"].shape[1]
    bn = params["w2"].shape[1]

    # Lane-dense padded feature widths.
    in_p = _round_up(in_f, 128)
    hid_p = _round_up(hid, 128)
    bn_p = _round_up(bn, 128)
    pmax = max(in_p, hid_p, bn_p)

    # --- batch tile: largest multiple of 8 fitting a conservative VMEM budget
    # (24 MiB: safe even under v7x's smaller per-TC VMEM) ---
    budget = 24 * 1024 * 1024
    tb = max(8, min(_round_up(B, 8), (block_b // 8) * 8))
    while tb > 8 and _vmem_estimate_bytes(tb, in_p, hid_p, bn_p, pmax) > budget:
        tb = max(8, ((tb // 2) // 8) * 8)
    Bp = _round_up(B, tb)

    # --- pad & cast operands ---
    def pad_w(w, rp, cp):
        w = jnp.pad(w, ((0, rp - w.shape[0]), (0, cp - w.shape[1])))
        return w.astype(compute_dtype)

    w1 = pad_w(params["w1"], in_p, hid_p)
    w2 = pad_w(params["w2"], hid_p, bn_p)
    w3 = pad_w(params["w3"], bn_p, hid_p)
    w4 = pad_w(params["w4"], hid_p, in_p)

    def pad_b(b):
        b = jnp.asarray(b, jnp.float32).reshape(1, -1)
        return jnp.pad(b, ((0, 0), (0, pmax - b.shape[1])))

    biases = jnp.concatenate(
        [pad_b(params["b1"]), pad_b(params["b2"]),
         pad_b(params["b3"]), pad_b(params["b4"])], axis=0)  # (4, pmax) f32

    xp = jnp.pad(x, ((0, Bp - B), (0, in_p - in_f))).astype(compute_dtype)

    grid = (Bp // tb,)

    kernel = functools.partial(autoencoder_kernel, in_p=in_p, hid_p=hid_p, bn_p=bn_p)

    # Advisory cost estimate (logical sizes).
    flops = 2 * B * (in_f * hid + hid * bn + bn * hid + hid * in_f)
    bytes_accessed = (
        x.size * 2
        + 2 * (in_f * hid + hid * bn + bn * hid + hid * in_f)
        + 4 * (2 * hid + bn + in_f)
        + 4 * B * (bn + in_f)
    )
    cost = pl.CostEstimate(flops=flops, transcendentals=0,
                           bytes_accessed=int(bytes_accessed))

    encoded_p, decoded_p = pl.pallas_call(
        kernel,
        out_shape=(
            jax.ShapeDtypeStruct((Bp, bn_p), jnp.float32),
            jax.ShapeDtypeStruct((Bp, in_p), jnp.float32),
        ),
        grid=grid,
        in_specs=[
            pl.BlockSpec((tb, in_p), lambda i: (i, 0)),      # x: tiled over batch
            pl.BlockSpec((in_p, hid_p), lambda i: (0, 0)),   # w1: resident
            pl.BlockSpec((hid_p, bn_p), lambda i: (0, 0)),   # w2: resident
            pl.BlockSpec((bn_p, hid_p), lambda i: (0, 0)),   # w3: resident
            pl.BlockSpec((hid_p, in_p), lambda i: (0, 0)),   # w4: resident
            pl.BlockSpec((4, pmax), lambda i: (0, 0)),       # packed biases: resident
        ],
        out_specs=(
            pl.BlockSpec((tb, bn_p), lambda i: (i, 0)),
            pl.BlockSpec((tb, in_p), lambda i: (i, 0)),
        ),
        compiler_params=pltpu.CompilerParams(
            dimension_semantics=("parallel",),
            vmem_limit_bytes=32 * 1024 * 1024,
        ),
        cost_estimate=cost,
    )(xp, w1, w2, w3, w4, biases)

    # Slice padded outputs back to logical shapes.
    return {
        "encoded": encoded_p[:B, :bn],
        "decoded": decoded_p[:B, :in_f],
    }


def init_params(key, input_size=2, hidden_size=10, bottleneck_size=1):
    """Deterministic init mimicking nn.Linear's uniform(-1/sqrt(fan_in), ...).
    Weights stored as (in_features, out_features); biases as (1, out_features)."""
    def linear(key, fan_in, fan_out):
        kw, kb = jax.random.split(key)
        bound = 1.0 / jnp.sqrt(fan_in)
        w = jax.random.uniform(kw, (fan_in, fan_out), jnp.float32, -bound, bound)
        b = jax.random.uniform(kb, (1, fan_out), jnp.float32, -bound, bound)
        return w, b

    k1, k2, k3, k4 = jax.random.split(key, 4)
    w1, b1 = linear(k1, input_size, hidden_size)
    w2, b2 = linear(k2, hidden_size, bottleneck_size)
    w3, b3 = linear(k3, bottleneck_size, hidden_size)
    w4, b4 = linear(k4, hidden_size, input_size)
    return {"w1": w1, "b1": b1, "w2": w2, "b2": b2,
            "w3": w3, "b3": b3, "w4": w4, "b4": b4}


def reference_forward_f32(x, p):
    h = jnp.maximum(x @ p["w1"] + p["b1"], 0.0)
    enc = h @ p["w2"] + p["b2"]
    h2 = jnp.maximum(enc @ p["w3"] + p["b3"], 0.0)
    dec = h2 @ p["w4"] + p["b4"]
    return {"encoded": enc, "decoded": dec}


def reference_forward_cast(x, p, compute_dtype=jnp.bfloat16):
    """Same casting discipline as the kernel (bf16 dots, f32 accumulation)."""
    def lin(a, w, b):
        return jnp.dot(a.astype(compute_dtype), w.astype(compute_dtype),
                       preferred_element_type=jnp.float32) + b
    h = jnp.maximum(lin(x, p["w1"], p["b1"]), 0.0)
    enc = lin(h, p["w2"], p["b2"])
    h2 = jnp.maximum(lin(enc, p["w3"], p["b3"]), 0.0)
    dec = lin(h2, p["w4"], p["b4"])
    return {"encoded": enc, "decoded": dec}


if __name__ == "__main__":
    key = jax.random.PRNGKey(0)
    k_params, k_x = jax.random.split(key)

    input_size, hidden_size, bottleneck_size = 2, 10, 1
    batch = 8

    params = init_params(k_params, input_size, hidden_size, bottleneck_size)
    x = jax.random.normal(k_x, (batch, input_size), jnp.float32)

    out = autoencoder_forward(x, params)
    jax.block_until_ready(out)

    assert out["encoded"].shape == (batch, bottleneck_size)
    assert out["decoded"].shape == (batch, input_size)

    ref_cast = reference_forward_cast(x, params)
    ref_f32 = reference_forward_f32(x, params)

    # Tight check against a reference with identical bf16 casting.
    assert jnp.allclose(out["encoded"], ref_cast["encoded"], atol=1e-3, rtol=1e-3)
    assert jnp.allclose(out["decoded"], ref_cast["decoded"], atol=1e-3, rtol=1e-3)
    # Loose check against the pure-f32 PyTorch-equivalent reference.
    assert jnp.allclose(out["encoded"], ref_f32["encoded"], atol=5e-2, rtol=5e-2)
    assert jnp.allclose(out["decoded"], ref_f32["decoded"], atol=5e-2, rtol=5e-2)

    print("KERNEL_OK")
</pallas_src>

<mosaic_0001>
module attributes {stable_mosaic.version = 11 : i64} {
  func.func @autoencoder_kernel(%arg0: i32, %arg1: memref<8x128xbf16, #tpu.memory_space<vmem>>, %arg2: memref<128x128xbf16, #tpu.memory_space<vmem>>, %arg3: memref<128x128xbf16, #tpu.memory_space<vmem>>, %arg4: memref<128x128xbf16, #tpu.memory_space<vmem>>, %arg5: memref<128x128xbf16, #tpu.memory_space<vmem>>, %arg6: memref<4x128xf32, #tpu.memory_space<vmem>>, %arg7: memref<8x128xf32, #tpu.memory_space<vmem>>, %arg8: memref<8x128xf32, #tpu.memory_space<vmem>>) attributes {dimension_semantics = [#tpu.dimension_semantics<parallel>], iteration_bounds = array<i64: 1>, scalar_prefetch = 0 : i64, scratch_operands = 0 : i64, tpu.core_type = #tpu.core_type<tc>, window_params = [{transform_indices = @transform_0, window_bounds = array<i64: 8, 128>}, {pipeline_mode = #tpu.pipeline_mode<synchronous>, transform_indices = @transform_1, window_bounds = array<i64: 128, 128>}, {pipeline_mode = #tpu.pipeline_mode<synchronous>, transform_indices = @transform_2, window_bounds = array<i64: 128, 128>}, {pipeline_mode = #tpu.pipeline_mode<synchronous>, transform_indices = @transform_3, window_bounds = array<i64: 128, 128>}, {pipeline_mode = #tpu.pipeline_mode<synchronous>, transform_indices = @transform_4, window_bounds = array<i64: 128, 128>}, {pipeline_mode = #tpu.pipeline_mode<synchronous>, transform_indices = @transform_5, window_bounds = array<i64: 4, 128>}, {transform_indices = @transform_6, window_bounds = array<i64: 8, 128>}, {transform_indices = @transform_7, window_bounds = array<i64: 8, 128>}]} {
    %c0 = arith.constant 0 : index
    %c0_0 = arith.constant 0 : index
    %0 = vector.load %arg1[%c0, %c0_0] : memref<8x128xbf16, #tpu.memory_space<vmem>>, vector<8x128xbf16>
    %c0_1 = arith.constant 0 : index
    %c0_2 = arith.constant 0 : index
    %1 = vector.load %arg6[%c0_1, %c0_2] : memref<4x128xf32, #tpu.memory_space<vmem>>, vector<1x128xf32>
    %c1 = arith.constant 1 : index
    %c0_3 = arith.constant 0 : index
    %2 = vector.load %arg6[%c1, %c0_3] : memref<4x128xf32, #tpu.memory_space<vmem>>, vector<1x128xf32>
    %c2 = arith.constant 2 : index
    %c0_4 = arith.constant 0 : index
    %3 = vector.load %arg6[%c2, %c0_4] : memref<4x128xf32, #tpu.memory_space<vmem>>, vector<1x128xf32>
    %c3 = arith.constant 3 : index
    %c0_5 = arith.constant 0 : index
    %4 = vector.load %arg6[%c3, %c0_5] : memref<4x128xf32, #tpu.memory_space<vmem>>, vector<1x128xf32>
    %c0_6 = arith.constant 0 : index
    %c0_7 = arith.constant 0 : index
    %5 = vector.load %arg2[%c0_6, %c0_7] : memref<128x128xbf16, #tpu.memory_space<vmem>>, vector<128x128xbf16>
    %cst = arith.constant dense<0.000000e+00> : vector<8x128xf32>
    %6 = tpu.matmul %0, %5, %cst {dimension_numbers = #tpu.dot_dimension_numbers<[1], [0], [0], [1], [0, 0, 1, 1], [], []>} : vector<8x128xbf16>, vector<128x128xbf16>, vector<8x128xf32> -> vector<8x128xf32>
    %7 = vector.broadcast %1 : vector<1x128xf32> to vector<8x128xf32>
    %8 = arith.addf %6, %7 : vector<8x128xf32>
    %cst_8 = arith.constant 0.000000e+00 : f32
    %9 = vector.broadcast %cst_8 : f32 to vector<8x128xf32>
    %10 = arith.maximumf %8, %9 : vector<8x128xf32>
    %11 = arith.truncf %10 : vector<8x128xf32> to vector<8x128xbf16>
    %c0_9 = arith.constant 0 : index
    %c0_10 = arith.constant 0 : index
    %12 = vector.load %arg3[%c0_9, %c0_10] : memref<128x128xbf16, #tpu.memory_space<vmem>>, vector<128x128xbf16>
    %cst_11 = arith.constant dense<0.000000e+00> : vector<8x128xf32>
    %13 = tpu.matmul %11, %12, %cst_11 {dimension_numbers = #tpu.dot_dimension_numbers<[1], [0], [0], [1], [0, 0, 1, 1], [], []>} : vector<8x128xbf16>, vector<128x128xbf16>, vector<8x128xf32> -> vector<8x128xf32>
    %14 = vector.broadcast %2 : vector<1x128xf32> to vector<8x128xf32>
    %15 = arith.addf %13, %14 : vector<8x128xf32>
    %c0_12 = arith.constant 0 : index
    %c0_13 = arith.constant 0 : index
    %16 = vector.load %arg7[%c0_12, %c0_13] : memref<8x128xf32, #tpu.memory_space<vmem>>, vector<8x128xf32>
    tpu.vector_store %arg7[%c0_12, %c0_13], %15 {strides = array<i32>} : memref<8x128xf32, #tpu.memory_space<vmem>>, vector<8x128xf32>,
    %17 = arith.truncf %15 : vector<8x128xf32> to vector<8x128xbf16>
    %c0_14 = arith.constant 0 : index
    %c0_15 = arith.constant 0 : index
    %18 = vector.load %arg4[%c0_14, %c0_15] : memref<128x128xbf16, #tpu.memory_space<vmem>>, vector<128x128xbf16>
    %cst_16 = arith.constant dense<0.000000e+00> : vector<8x128xf32>
    %19 = tpu.matmul %17, %18, %cst_16 {dimension_numbers = #tpu.dot_dimension_numbers<[1], [0], [0], [1], [0, 0, 1, 1], [], []>} : vector<8x128xbf16>, vector<128x128xbf16>, vector<8x128xf32> -> vector<8x128xf32>
    %20 = vector.broadcast %3 : vector<1x128xf32> to vector<8x128xf32>
    %21 = arith.addf %19, %20 : vector<8x128xf32>
    %cst_17 = arith.constant 0.000000e+00 : f32
    %22 = vector.broadcast %cst_17 : f32 to vector<8x128xf32>
    %23 = arith.maximumf %21, %22 : vector<8x128xf32>
    %24 = arith.truncf %23 : vector<8x128xf32> to vector<8x128xbf16>
    %c0_18 = arith.constant 0 : index
    %c0_19 = arith.constant 0 : index
    %25 = vector.load %arg5[%c0_18, %c0_19] : memref<128x128xbf16, #tpu.memory_space<vmem>>, vector<128x128xbf16>
    %cst_20 = arith.constant dense<0.000000e+00> : vector<8x128xf32>
    %26 = tpu.matmul %24, %25, %cst_20 {dimension_numbers = #tpu.dot_dimension_numbers<[1], [0], [0], [1], [0, 0, 1, 1], [], []>} : vector<8x128xbf16>, vector<128x128xbf16>, vector<8x128xf32> -> vector<8x128xf32>
    %27 = vector.broadcast %4 : vector<1x128xf32> to vector<8x128xf32>
    %28 = arith.addf %26, %27 : vector<8x128xf32>
    %c0_21 = arith.constant 0 : index
    %c0_22 = arith.constant 0 : index
    %29 = vector.load %arg8[%c0_21, %c0_22] : memref<8x128xf32, #tpu.memory_space<vmem>>, vector<8x128xf32>
    tpu.vector_store %arg8[%c0_21, %c0_22], %28 {strides = array<i32>} : memref<8x128xf32, #tpu.memory_space<vmem>>, vector<8x128xf32>,
    return
  }
  func.func @transform_0(%arg0: i32) -> (i32, i32) {
    %c0_i32 = arith.constant 0 : i32
    %c0_i32_0 = arith.constant 0 : i32
    return %arg0, %c0_i32 : i32, i32
  }
  func.func @transform_1(%arg0: i32) -> (i32, i32) {
    %c0_i32 = arith.constant 0 : i32
    %c0_i32_0 = arith.constant 0 : i32
    %c0_i32_1 = arith.constant 0 : i32
    return %c0_i32, %c0_i32_0 : i32, i32
  }
  func.func @transform_2(%arg0: i32) -> (i32, i32) {
    %c0_i32 = arith.constant 0 : i32
    %c0_i32_0 = arith.constant 0 : i32
    %c0_i32_1 = arith.constant 0 : i32
    return %c0_i32, %c0_i32_0 : i32, i32
  }
  func.func @transform_3(%arg0: i32) -> (i32, i32) {
    %c0_i32 = arith.constant 0 : i32
    %c0_i32_0 = arith.constant 0 : i32
    %c0_i32_1 = arith.constant 0 : i32
    return %c0_i32, %c0_i32_0 : i32, i32
  }
  func.func @transform_4(%arg0: i32) -> (i32, i32) {
    %c0_i32 = arith.constant 0 : i32
    %c0_i32_0 = arith.constant 0 : i32
    %c0_i32_1 = arith.constant 0 : i32
    return %c0_i32, %c0_i32_0 : i32, i32
  }
  func.func @transform_5(%arg0: i32) -> (i32, i32) {
    %c0_i32 = arith.constant 0 : i32
    %c0_i32_0 = arith.constant 0 : i32
    %c0_i32_1 = arith.constant 0 : i32
    return %c0_i32, %c0_i32_0 : i32, i32
  }
  func.func @transform_6(%arg0: i32) -> (i32, i32) {
    %c0_i32 = arith.constant 0 : i32
    %c0_i32_0 = arith.constant 0 : i32
    return %arg0, %c0_i32 : i32, i32
  }
  func.func @transform_7(%arg0: i32) -> (i32, i32) {
    %c0_i32 = arith.constant 0 : i32
    %c0_i32_0 = arith.constant 0 : i32
    return %arg0, %c0_i32 : i32, i32
  }
}

</mosaic_0001>

<llo_original>
// kernel: tpu_custom_call.1
$region0: #{tpu_custom_call.1}
  #allocation0 [shape = 'u32[]', space=smem, size = 0x4, offset = 0x4, fixed_abs, tag = 'smem constant byte address 0x4 - core index']
  #allocation1 [shape = 'u32[144,128]{1,0:T(1,128)}', space=vmem, size = 0x12000, scoped, tag = 'internal scratch']
  %s0 = inlined_call_operand.hbm [shape: bf16[8,128], index: 0, kind: input, shape index: {}]
  %s1 = inlined_call_operand.hbm [shape: bf16[128,128], index: 1, kind: input, shape index: {}]
  %s2 = inlined_call_operand.hbm [shape: bf16[128,128], index: 2, kind: input, shape index: {}]
  %s3 = inlined_call_operand.hbm [shape: bf16[128,128], index: 3, kind: input, shape index: {}]
  %s4 = inlined_call_operand.hbm [shape: bf16[128,128], index: 4, kind: input, shape index: {}]
  %s5 = inlined_call_operand.vmem [shape: f32[4,128], index: 5, kind: input, shape index: {}]
  %s6 = inlined_call_operand.hbm [shape: f32[8,128], index: 6, kind: output, shape index: {0}]
  %s7 = inlined_call_operand.hbm [shape: f32[8,128], index: 7, kind: output, shape index: {1}]
  %8 = xla_tuple %s6, %s7
  %s9 = sld [smem:[#allocation0]]
  $region62: #{tpu_custom_call.1} parent=0
    _
  %s11 = ssub.s32 1, %s9
  %s12 = scalar_select 0, %s11, %s9
  $region1: #{tpu_custom_call.1} parent=0
    #allocation2 [shape = 'u8[2048]{0}', space=vmem, size = 0x800, scoped, tag = 'input window, operand 0, single buffered']
    #allocation3 [shape = 's32[1]{0}', space=sflag, size = 0x4, scoped, tag = 'scoped memory for tpu_custom_call.1']
    #allocation4 [shape = 's32[1]{0}', space=sflag, size = 0x4, scoped, tag = 'scoped memory for tpu_custom_call.1']
    #allocation5 [shape = 'u8[32768]{0}', space=vmem, size = 0x8000, scoped, tag = 'input window, operand 1, single buffered']
    #allocation6 [shape = 's32[1]{0}', space=sflag, size = 0x4, scoped, tag = 'scoped memory for tpu_custom_call.1']
    #allocation7 [shape = 'u8[32768]{0}', space=vmem, size = 0x8000, scoped, tag = 'input window, operand 2, single buffered']
    #allocation8 [shape = 'u8[32768]{0}', space=vmem, size = 0x8000, scoped, tag = 'input window, operand 3, single buffered']
    #allocation9 [shape = 's32[1]{0}', space=sflag, size = 0x4, scoped, tag = 'scoped memory for tpu_custom_call.1']
    #allocation10 [shape = 'u8[32768]{0}', space=vmem, size = 0x8000, scoped, tag = 'input window, operand 4, single buffered']
    #allocation11 [shape = 'u8[4096]{0}', space=vmem, size = 0x1000, scoped, tag = 'output window, operand 0, single buffered']
    #allocation12 [shape = 'u8[4096]{0}', space=vmem, size = 0x1000, scoped, tag = 'output window, operand 1, single buffered']
    #allocation13 [shape = 's32[1]{0}', space=sflag, size = 0x4, scoped, tag = 'scoped memory for tpu_custom_call.1']
    %13 = vsyncpa [#allocation3], 0
    %14 = vsyncpa [#allocation6], 0
    %15 = vsyncpa [#allocation9], 0
    %16 = vsyncpa [#allocation4], 0
    %17 = vsyncpa [#allocation13], 0
    // Predicated region
    $region2: #{tpu_custom_call.1} parent=1 // pred_check
      _
    $region3: #{tpu_custom_call.1} parent=1 // pred_check_branch
      %19 = sbr.rel (0) target = $region5
    $region4: #{tpu_custom_call.1} parent=1 // pred_region
      %s21 = ssub.s32 64, 64
      %22 = vsyncadd [#allocation3], %s21
      %s24 = sshll.u32 [#allocation2], 4
      %s25 = int_to_ptr.vmem [resolvable:$true] %s24
      %27 = dma.hbm_to_vmem [thread:$0]  %s0, 64, %s25, [#allocation3]
    $region5: #{tpu_custom_call.1} parent=1 // pred_fallthru
      _
    // Predicated region
    $region6: #{tpu_custom_call.1} parent=1 // pred_check
      _
    $region7: #{tpu_custom_call.1} parent=1 // pred_check_branch
      %29 = sbr.rel (0) target = $region9
    $region8: #{tpu_custom_call.1} parent=1 // pred_region
      %s31 = ssub.s32 1024, 1024
      %32 = vsyncadd [#allocation6], %s31
      %s33 = sshll.u32 [#allocation5], 4
      %s34 = int_to_ptr.vmem [resolvable:$true] %s33
      %39 = dma.hbm_to_vmem [thread:$0]  %s1, 1024, %s34, [#allocation6], 64, 64, 4
    $region9: #{tpu_custom_call.1} parent=1 // pred_fallthru
      _
    // Predicated region
    $region10: #{tpu_custom_call.1} parent=1 // pred_check
      _
    $region11: #{tpu_custom_call.1} parent=1 // pred_check_branch
      %41 = sbr.rel (0) target = $region13
    $region12: #{tpu_custom_call.1} parent=1 // pred_region
      %s43 = ssub.s32 1024, 1024
      %44 = vsyncadd [#allocation6], %s43
      %s45 = sshll.u32 [#allocation7], 4
      %s46 = int_to_ptr.vmem [resolvable:$true] %s45
      %51 = dma.hbm_to_vmem [thread:$0]  %s2, 1024, %s46, [#allocation6], 64, 64, 4
    $region13: #{tpu_custom_call.1} parent=1 // pred_fallthru
      _
    // Predicated region
    $region14: #{tpu_custom_call.1} parent=1 // pred_check
      _
    $region15: #{tpu_custom_call.1} parent=1 // pred_check_branch
      %53 = sbr.rel (0) target = $region17
    $region16: #{tpu_custom_call.1} parent=1 // pred_region
      %s55 = ssub.s32 1024, 1024
      %56 = vsyncadd [#allocation9], %s55
      %s57 = sshll.u32 [#allocation8], 4
      %s58 = int_to_ptr.vmem [resolvable:$true] %s57
      %63 = dma.hbm_to_vmem [thread:$0]  %s3, 1024, %s58, [#allocation9], 64, 64, 4
    $region17: #{tpu_custom_call.1} parent=1 // pred_fallthru
      _
    // Predicated region
    $region18: #{tpu_custom_call.1} parent=1 // pred_check
      _
    $region19: #{tpu_custom_call.1} parent=1 // pred_check_branch
      %65 = sbr.rel (0) target = $region21
    $region20: #{tpu_custom_call.1} parent=1 // pred_region
      %s67 = ssub.s32 1024, 1024
      %68 = vsyncadd [#allocation9], %s67
      %s69 = sshll.u32 [#allocation10], 4
      %s70 = int_to_ptr.vmem [resolvable:$true] %s69
      %75 = dma.hbm_to_vmem [thread:$0]  %s4, 1024, %s70, [#allocation9], 64, 64, 4
    $region21: #{tpu_custom_call.1} parent=1 // pred_fallthru
      _
    // Predicated region
    $region22: #{tpu_custom_call.1} parent=1 // pred_check
      _
    $region23: #{tpu_custom_call.1} parent=1 // pred_check_branch
      %77 = sbr.rel (0) target = $region25
    $region24: #{tpu_custom_call.1} parent=1 // pred_region
      _
    $region25: #{tpu_custom_call.1} parent=1 // pred_fallthru
      _
    // Predicated region
    $region26: #{tpu_custom_call.1} parent=1 // pred_check
      _
    $region27: #{tpu_custom_call.1} parent=1 // pred_check_branch
      %79 = sbr.rel (0) target = $region29
    $region28: #{tpu_custom_call.1} parent=1 // pred_region
      %80 = dma.done [#allocation3], 64
    $region29: #{tpu_custom_call.1} parent=1 // pred_fallthru
      _
    // Predicated region
    $region30: #{tpu_custom_call.1} parent=1 // pred_check
      _
    $region31: #{tpu_custom_call.1} parent=1 // pred_check_branch
      %82 = sbr.rel (0) target = $region33
    $region32: #{tpu_custom_call.1} parent=1 // pred_region
      %83 = dma.done [#allocation6], 1024
    $region33: #{tpu_custom_call.1} parent=1 // pred_fallthru
      _
    // Predicated region
    $region34: #{tpu_custom_call.1} parent=1 // pred_check
      _
    $region35: #{tpu_custom_call.1} parent=1 // pred_check_branch
      %85 = sbr.rel (0) target = $region37
    $region36: #{tpu_custom_call.1} parent=1 // pred_region
      %86 = dma.done [#allocation6], 1024
    $region37: #{tpu_custom_call.1} parent=1 // pred_fallthru
      _
    // Predicated region
    $region38: #{tpu_custom_call.1} parent=1 // pred_check
      _
    $region39: #{tpu_custom_call.1} parent=1 // pred_check_branch
      %88 = sbr.rel (0) target = $region41
    $region40: #{tpu_custom_call.1} parent=1 // pred_region
      %89 = dma.done [#allocation9], 1024
    $region41: #{tpu_custom_call.1} parent=1 // pred_fallthru
      _
    // Predicated region
    $region42: #{tpu_custom_call.1} parent=1 // pred_check
      _
    $region43: #{tpu_custom_call.1} parent=1 // pred_check_branch
      %91 = sbr.rel (0) target = $region45
    $region44: #{tpu_custom_call.1} parent=1 // pred_region
      %92 = dma.done [#allocation9], 1024
    $region45: #{tpu_custom_call.1} parent=1 // pred_fallthru
      _
    %v94 = vld [vmem:[#allocation2] sm:$0xf]
    %v95 = vld [vmem:[%s5] sm:$0x1]
    %v96 = vld [vmem:[%s5 + $0x1] sm:$0x1]
    %v97 = vld [vmem:[%s5 + $0x2] sm:$0x1]
    %v98 = vld [vmem:[%s5 + $0x3] sm:$0x1]
    %v99 = vld [vmem:[#allocation5] sm:$0xf]
    %v100 = vld [vmem:[#allocation5 + $0x4] sm:$0xf]
    %v101 = vld [vmem:[#allocation5 + $0x8] sm:$0xf]
    %v102 = vld [vmem:[#allocation5 + $0xc] sm:$0xf]
    %v103 = vld [vmem:[#allocation5 + $0x10] sm:$0xf]
    %v104 = vld [vmem:[#allocation5 + $0x14] sm:$0xf]
    %v105 = vld [vmem:[#allocation5 + $0x18] sm:$0xf]
    %v106 = vld [vmem:[#allocation5 + $0x1c] sm:$0xf]
    %v107 = vld [vmem:[#allocation5 + $0x20] sm:$0xf]
    %v108 = vld [vmem:[#allocation5 + $0x24] sm:$0xf]
    %v109 = vld [vmem:[#allocation5 + $0x28] sm:$0xf]
    %v110 = vld [vmem:[#allocation5 + $0x2c] sm:$0xf]
    %v111 = vld [vmem:[#allocation5 + $0x30] sm:$0xf]
    %v112 = vld [vmem:[#allocation5 + $0x34] sm:$0xf]
    %v113 = vld [vmem:[#allocation5 + $0x38] sm:$0xf]
    %v114 = vld [vmem:[#allocation5 + $0x3c] sm:$0xf]
    %v115 = vlaneseq
    %v116 = vshrl.u32 %v115, 7
    %v117 = vsub.s32 0, %v116
    %v118 = vrot.slane %v95, %v117
    %v135 = vunpack.c.l.b16 %v99
    %v136 = vunpack.c.l.b16 %v100
    %v137 = vunpack.c.l.b16 %v101
    %v138 = vunpack.c.l.b16 %v102
    %v139 = vunpack.c.l.b16 %v103
    %v140 = vunpack.c.l.b16 %v104
    %v141 = vunpack.c.l.b16 %v105
    %v142 = vunpack.c.l.b16 %v106
    %v143 = vunpack.c.l.b16 %v107
    %v144 = vunpack.c.l.b16 %v108
    %v145 = vunpack.c.l.b16 %v109
    %v146 = vunpack.c.l.b16 %v110
    %v147 = vunpack.c.l.b16 %v111
    %v148 = vunpack.c.l.b16 %v112
    %v149 = vunpack.c.l.b16 %v113
    %v150 = vunpack.c.l.b16 %v114
    %v151 = vpack.c.b16 %v136, %v135
    %v152 = vpack.c.b16 %v138, %v137
    %v153 = vpack.c.b16 %v140, %v139
    %v154 = vpack.c.b16 %v142, %v141
    %v155 = vpack.c.b16 %v144, %v143
    %v156 = vpack.c.b16 %v146, %v145
    %v157 = vpack.c.b16 %v148, %v147
    %v158 = vpack.c.b16 %v150, %v149
    %167 = vmatprep.subr.bf16.mxu0 0
    %168 = vmatpush1.bf16.msra.mxu0 %v151
    %169 = vmatprep.subr.bf16.mxu0 0
    %170 = vmatpush1.bf16.msra.mxu0 %v152
    %171 = vmatprep.subr.bf16.mxu0 0
    %172 = vmatpush1.bf16.msra.mxu0 %v153
    %173 = vmatprep.subr.bf16.mxu0 0
    %174 = vmatpush1.bf16.msra.mxu0 %v154
    %175 = vmatprep.subr.bf16.mxu0 0
    %176 = vmatpush1.bf16.msra.mxu0 %v155
    %177 = vmatprep.subr.bf16.mxu0 0
    %178 = vmatpush1.bf16.msra.mxu0 %v156
    %179 = vmatprep.subr.bf16.mxu0 0
    %180 = vmatpush1.bf16.msra.mxu0 %v157
    %181 = vmatprep.subr.bf16.mxu0 0
    %182 = vmatpush1.bf16.msra.mxu0 %v158
    %183 = vmatprep.subr.bf16.mxu0 0
    %184 = vmatpush1.bf16.msra.mxu0 0
    %185 = vmatprep.subr.bf16.mxu0 0
    %186 = vmatpush1.bf16.msra.mxu0 0
    %187 = vmatprep.subr.bf16.mxu0 0
    %188 = vmatpush1.bf16.msra.mxu0 0
    %189 = vmatprep.subr.bf16.mxu0 0
    %190 = vmatpush1.bf16.msra.mxu0 0
    %191 = vmatprep.subr.bf16.mxu0 0
    %192 = vmatpush1.bf16.msra.mxu0 0
    %193 = vmatprep.subr.bf16.mxu0 0
    %194 = vmatpush1.bf16.msra.mxu0 0
    %195 = vmatprep.subr.bf16.mxu0 0
    %196 = vmatpush1.bf16.msra.mxu0 0
    %197 = vmatprep.subr.bf16.mxu0 0
    %198 = vmatpush1.bf16.msra.mxu0 0
    %199 = vmatprep.mubr.bf16.mxu0 0
    %200 = vmatmul.mubr.bf16.gmra.mrb[0].mxu0 %v94
    %v201 = vpop.f32.mrb[0].mxu0
    %v202 = vadd.f32 %v118, %v201
    %v203 = vpop.f32.mrb[0].mxu0
    %v204 = vpop.f32.mrb[0].mxu0
    %v205 = vpop.f32.mrb[0].mxu0
    %206 = vdwg.mxu0
    %v207 = vmax.f32 %v202, 0.0
    %v208 = vpack.c.bf16 %v207, %v207
    %v209 = vld [vmem:[#allocation7] sm:$0xf]
    %v210 = vld [vmem:[#allocation7 + $0x4] sm:$0xf]
    %v211 = vld [vmem:[#allocation7 + $0x8] sm:$0xf]
    %v212 = vld [vmem:[#allocation7 + $0xc] sm:$0xf]
    %v213 = vld [vmem:[#allocation7 + $0x10] sm:$0xf]
    %v214 = vld [vmem:[#allocation7 + $0x14] sm:$0xf]
    %v215 = vld [vmem:[#allocation7 + $0x18] sm:$0xf]
    %v216 = vld [vmem:[#allocation7 + $0x1c] sm:$0xf]
    %v217 = vld [vmem:[#allocation7 + $0x20] sm:$0xf]
    %v218 = vld [vmem:[#allocation7 + $0x24] sm:$0xf]
    %v219 = vld [vmem:[#allocation7 + $0x28] sm:$0xf]
    %v220 = vld [vmem:[#allocation7 + $0x2c] sm:$0xf]
    %v221 = vld [vmem:[#allocation7 + $0x30] sm:$0xf]
    %v222 = vld [vmem:[#allocation7 + $0x34] sm:$0xf]
    %v223 = vld [vmem:[#allocation7 + $0x38] sm:$0xf]
    %v224 = vld [vmem:[#allocation7 + $0x3c] sm:$0xf]
    %v225 = vlaneseq
    %v226 = vshrl.u32 %v225, 7
    %v227 = vsub.s32 0, %v226
    %v228 = vrot.slane %v96, %v227
    %v245 = vunpack.c.l.b16 %v209
    %v246 = vunpack.c.l.b16 %v210
    %v247 = vunpack.c.l.b16 %v211
    %v248 = vunpack.c.l.b16 %v212
    %v249 = vunpack.c.l.b16 %v213
    %v250 = vunpack.c.l.b16 %v214
    %v251 = vunpack.c.l.b16 %v215
    %v252 = vunpack.c.l.b16 %v216
    %v253 = vunpack.c.l.b16 %v217
    %v254 = vunpack.c.l.b16 %v218
    %v255 = vunpack.c.l.b16 %v219
    %v256 = vunpack.c.l.b16 %v220
    %v257 = vunpack.c.l.b16 %v221
    %v258 = vunpack.c.l.b16 %v222
    %v259 = vunpack.c.l.b16 %v223
    %v260 = vunpack.c.l.b16 %v224
    %v261 = vpack.c.b16 %v246, %v245
    %v262 = vpack.c.b16 %v248, %v247
    %v263 = vpack.c.b16 %v250, %v249
    %v264 = vpack.c.b16 %v252, %v251
    %v265 = vpack.c.b16 %v254, %v253
    %v266 = vpack.c.b16 %v256, %v255
    %v267 = vpack.c.b16 %v258, %v257
    %v268 = vpack.c.b16 %v260, %v259
    %277 = vmatprep.subr.bf16.mxu0 0
    %278 = vmatpush1.bf16.msra.mxu0 %v261
    %279 = vmatprep.subr.bf16.mxu0 0
    %280 = vmatpush1.bf16.msra.mxu0 %v262
    %281 = vmatprep.subr.bf16.mxu0 0
    %282 = vmatpush1.bf16.msra.mxu0 %v263
    %283 = vmatprep.subr.bf16.mxu0 0
    %284 = vmatpush1.bf16.msra.mxu0 %v264
    %285 = vmatprep.subr.bf16.mxu0 0
    %286 = vmatpush1.bf16.msra.mxu0 %v265
    %287 = vmatprep.subr.bf16.mxu0 0
    %288 = vmatpush1.bf16.msra.mxu0 %v266
    %289 = vmatprep.subr.bf16.mxu0 0
    %290 = vmatpush1.bf16.msra.mxu0 %v267
    %291 = vmatprep.subr.bf16.mxu0 0
    %292 = vmatpush1.bf16.msra.mxu0 %v268
    %293 = vmatprep.subr.bf16.mxu0 0
    %294 = vmatpush1.bf16.msra.mxu0 0
    %295 = vmatprep.subr.bf16.mxu0 0
    %296 = vmatpush1.bf16.msra.mxu0 0
    %297 = vmatprep.subr.bf16.mxu0 0
    %298 = vmatpush1.bf16.msra.mxu0 0
    %299 = vmatprep.subr.bf16.mxu0 0
    %300 = vmatpush1.bf16.msra.mxu0 0
    %301 = vmatprep.subr.bf16.mxu0 0
    %302 = vmatpush1.bf16.msra.mxu0 0
    %303 = vmatprep.subr.bf16.mxu0 0
    %304 = vmatpush1.bf16.msra.mxu0 0
    %305 = vmatprep.subr.bf16.mxu0 0
    %306 = vmatpush1.bf16.msra.mxu0 0
    %307 = vmatprep.subr.bf16.mxu0 0
    %308 = vmatpush1.bf16.msra.mxu0 0
    %309 = vmatprep.mubr.bf16.mxu0 0
    %310 = vmatmul.mubr.bf16.gmra.mrb[0].mxu0 %v208
    %v311 = vpop.f32.mrb[0].mxu0
    %v312 = vadd.f32 %v228, %v311
    %v313 = vpop.f32.mrb[0].mxu0
    %v314 = vpop.f32.mrb[0].mxu0
    %v315 = vpop.f32.mrb[0].mxu0
    %316 = vdwg.mxu0
    %317 = vst [vmem:[#allocation11] sm:$0xff] %v312
    %v318 = vpack.c.bf16 %v312, %v312
    %v319 = vld [vmem:[#allocation8] sm:$0xf]
    %v320 = vld [vmem:[#allocation8 + $0x4] sm:$0xf]
    %v321 = vld [vmem:[#allocation8 + $0x8] sm:$0xf]
    %v322 = vld [vmem:[#allocation8 + $0xc] sm:$0xf]
    %v323 = vld [vmem:[#allocation8 + $0x10] sm:$0xf]
    %v324 = vld [vmem:[#allocation8 + $0x14] sm:$0xf]
    %v325 = vld [vmem:[#allocation8 + $0x18] sm:$0xf]
    %v326 = vld [vmem:[#allocation8 + $0x1c] sm:$0xf]
    %v327 = vld [vmem:[#allocation8 + $0x20] sm:$0xf]
    %v328 = vld [vmem:[#allocation8 + $0x24] sm:$0xf]
    %v329 = vld [vmem:[#allocation8 + $0x28] sm:$0xf]
    %v330 = vld [vmem:[#allocation8 + $0x2c] sm:$0xf]
    %v331 = vld [vmem:[#allocation8 + $0x30] sm:$0xf]
    %v332 = vld [vmem:[#allocation8 + $0x34] sm:$0xf]
    %v333 = vld [vmem:[#allocation8 + $0x38] sm:$0xf]
    %v334 = vld [vmem:[#allocation8 + $0x3c] sm:$0xf]
    %v335 = vlaneseq
    %v336 = vshrl.u32 %v335, 7
    %v337 = vsub.s32 0, %v336
    %v338 = vrot.slane %v97, %v337
    %v355 = vunpack.c.l.b16 %v319
    %v356 = vunpack.c.l.b16 %v320
    %v357 = vunpack.c.l.b16 %v321
    %v358 = vunpack.c.l.b16 %v322
    %v359 = vunpack.c.l.b16 %v323
    %v360 = vunpack.c.l.b16 %v324
    %v361 = vunpack.c.l.b16 %v325
    %v362 = vunpack.c.l.b16 %v326
    %v363 = vunpack.c.l.b16 %v327
    %v364 = vunpack.c.l.b16 %v328
    %v365 = vunpack.c.l.b16 %v329
    %v366 = vunpack.c.l.b16 %v330
    %v367 = vunpack.c.l.b16 %v331
    %v368 = vunpack.c.l.b16 %v332
    %v369 = vunpack.c.l.b16 %v333
    %v370 = vunpack.c.l.b16 %v334
    %v371 = vpack.c.b16 %v356, %v355
    %v372 = vpack.c.b16 %v358, %v357
    %v373 = vpack.c.b16 %v360, %v359
    %v374 = vpack.c.b16 %v362, %v361
    %v375 = vpack.c.b16 %v364, %v363
    %v376 = vpack.c.b16 %v366, %v365
    %v377 = vpack.c.b16 %v368, %v367
    %v378 = vpack.c.b16 %v370, %v369
    %387 = vmatprep.subr.bf16.mxu0 0
    %388 = vmatpush1.bf16.msra.mxu0 %v371
    %389 = vmatprep.subr.bf16.mxu0 0
    %390 = vmatpush1.bf16.msra.mxu0 %v372
    %391 = vmatprep.subr.bf16.mxu0 0
    %392 = vmatpush1.bf16.msra.mxu0 %v373
    %393 = vmatprep.subr.bf16.mxu0 0
    %394 = vmatpush1.bf16.msra.mxu0 %v374
    %395 = vmatprep.subr.bf16.mxu0 0
    %396 = vmatpush1.bf16.msra.mxu0 %v375
    %397 = vmatprep.subr.bf16.mxu0 0
    %398 = vmatpush1.bf16.msra.mxu0 %v376
    %399 = vmatprep.subr.bf16.mxu0 0
    %400 = vmatpush1.bf16.msra.mxu0 %v377
    %401 = vmatprep.subr.bf16.mxu0 0
    %402 = vmatpush1.bf16.msra.mxu0 %v378
    %403 = vmatprep.subr.bf16.mxu0 0
    %404 = vmatpush1.bf16.msra.mxu0 0
    %405 = vmatprep.subr.bf16.mxu0 0
    %406 = vmatpush1.bf16.msra.mxu0 0
    %407 = vmatprep.subr.bf16.mxu0 0
    %408 = vmatpush1.bf16.msra.mxu0 0
    %409 = vmatprep.subr.bf16.mxu0 0
    %410 = vmatpush1.bf16.msra.mxu0 0
    %411 = vmatprep.subr.bf16.mxu0 0
    %412 = vmatpush1.bf16.msra.mxu0 0
    %413 = vmatprep.subr.bf16.mxu0 0
    %414 = vmatpush1.bf16.msra.mxu0 0
    %415 = vmatprep.subr.bf16.mxu0 0
    %416 = vmatpush1.bf16.msra.mxu0 0
    %417 = vmatprep.subr.bf16.mxu0 0
    %418 = vmatpush1.bf16.msra.mxu0 0
    %419 = vmatprep.mubr.bf16.mxu0 0
    %420 = vmatmul.mubr.bf16.gmra.mrb[0].mxu0 %v318
    %v421 = vpop.f32.mrb[0].mxu0
    %v422 = vadd.f32 %v338, %v421
    %v423 = vpop.f32.mrb[0].mxu0
    %v424 = vpop.f32.mrb[0].mxu0
    %v425 = vpop.f32.mrb[0].mxu0
    %426 = vdwg.mxu0
    %v427 = vmax.f32 %v422, 0.0
    %v428 = vpack.c.bf16 %v427, %v427
    %v429 = vld [vmem:[#allocation10] sm:$0xf]
    %v430 = vld [vmem:[#allocation10 + $0x4] sm:$0xf]
    %v431 = vld [vmem:[#allocation10 + $0x8] sm:$0xf]
    %v432 = vld [vmem:[#allocation10 + $0xc] sm:$0xf]
    %v433 = vld [vmem:[#allocation10 + $0x10] sm:$0xf]
    %v434 = vld [vmem:[#allocation10 + $0x14] sm:$0xf]
    %v435 = vld [vmem:[#allocation10 + $0x18] sm:$0xf]
    %v436 = vld [vmem:[#allocation10 + $0x1c] sm:$0xf]
    %v437 = vld [vmem:[#allocation10 + $0x20] sm:$0xf]
    %v438 = vld [vmem:[#allocation10 + $0x24] sm:$0xf]
    %v439 = vld [vmem:[#allocation10 + $0x28] sm:$0xf]
    %v440 = vld [vmem:[#allocation10 + $0x2c] sm:$0xf]
    %v441 = vld [vmem:[#allocation10 + $0x30] sm:$0xf]
    %v442 = vld [vmem:[#allocation10 + $0x34] sm:$0xf]
    %v443 = vld [vmem:[#allocation10 + $0x38] sm:$0xf]
    %v444 = vld [vmem:[#allocation10 + $0x3c] sm:$0xf]
    %v445 = vlaneseq
    %v446 = vshrl.u32 %v445, 7
    %v447 = vsub.s32 0, %v446
    %v448 = vrot.slane %v98, %v447
    %v465 = vunpack.c.l.b16 %v429
    %v466 = vunpack.c.l.b16 %v430
    %v467 = vunpack.c.l.b16 %v431
    %v468 = vunpack.c.l.b16 %v432
    %v469 = vunpack.c.l.b16 %v433
    %v470 = vunpack.c.l.b16 %v434
    %v471 = vunpack.c.l.b16 %v435
    %v472 = vunpack.c.l.b16 %v436
    %v473 = vunpack.c.l.b16 %v437
    %v474 = vunpack.c.l.b16 %v438
    %v475 = vunpack.c.l.b16 %v439
    %v476 = vunpack.c.l.b16 %v440
    %v477 = vunpack.c.l.b16 %v441
    %v478 = vunpack.c.l.b16 %v442
    %v479 = vunpack.c.l.b16 %v443
    %v480 = vunpack.c.l.b16 %v444
    %v481 = vpack.c.b16 %v466, %v465
    %v482 = vpack.c.b16 %v468, %v467
    %v483 = vpack.c.b16 %v470, %v469
    %v484 = vpack.c.b16 %v472, %v471
    %v485 = vpack.c.b16 %v474, %v473
    %v486 = vpack.c.b16 %v476, %v475
    %v487 = vpack.c.b16 %v478, %v477
    %v488 = vpack.c.b16 %v480, %v479
    %497 = vmatprep.subr.bf16.mxu0 0
    %498 = vmatpush1.bf16.msra.mxu0 %v481
    %499 = vmatprep.subr.bf16.mxu0 0
    %500 = vmatpush1.bf16.msra.mxu0 %v482
    %501 = vmatprep.subr.bf16.mxu0 0
    %502 = vmatpush1.bf16.msra.mxu0 %v483
    %503 = vmatprep.subr.bf16.mxu0 0
    %504 = vmatpush1.bf16.msra.mxu0 %v484
    %505 = vmatprep.subr.bf16.mxu0 0
    %506 = vmatpush1.bf16.msra.mxu0 %v485
    %507 = vmatprep.subr.bf16.mxu0 0
    %508 = vmatpush1.bf16.msra.mxu0 %v486
    %509 = vmatprep.subr.bf16.mxu0 0
    %510 = vmatpush1.bf16.msra.mxu0 %v487
    %511 = vmatprep.subr.bf16.mxu0 0
    %512 = vmatpush1.bf16.msra.mxu0 %v488
    %513 = vmatprep.subr.bf16.mxu0 0
    %514 = vmatpush1.bf16.msra.mxu0 0
    %515 = vmatprep.subr.bf16.mxu0 0
    %516 = vmatpush1.bf16.msra.mxu0 0
    %517 = vmatprep.subr.bf16.mxu0 0
    %518 = vmatpush1.bf16.msra.mxu0 0
    %519 = vmatprep.subr.bf16.mxu0 0
    %520 = vmatpush1.bf16.msra.mxu0 0
    %521 = vmatprep.subr.bf16.mxu0 0
    %522 = vmatpush1.bf16.msra.mxu0 0
    %523 = vmatprep.subr.bf16.mxu0 0
    %524 = vmatpush1.bf16.msra.mxu0 0
    %525 = vmatprep.subr.bf16.mxu0 0
    %526 = vmatpush1.bf16.msra.mxu0 0
    %527 = vmatprep.subr.bf16.mxu0 0
    %528 = vmatpush1.bf16.msra.mxu0 0
    %529 = vmatprep.mubr.bf16.mxu0 0
    %530 = vmatmul.mubr.bf16.gmra.mrb[0].mxu0 %v428
    %v531 = vpop.f32.mrb[0].mxu0
    %v532 = vadd.f32 %v448, %v531
    %v533 = vpop.f32.mrb[0].mxu0
    %v534 = vpop.f32.mrb[0].mxu0
    %v535 = vpop.f32.mrb[0].mxu0
    %536 = vdwg.mxu0
    %537 = vst [vmem:[#allocation12] sm:$0xff] %v532
    // Predicated region
    $region46: #{tpu_custom_call.1} parent=1 // pred_check
      _
    $region47: #{tpu_custom_call.1} parent=1 // pred_check_branch
      %539 = sbr.rel (0) target = $region49
    $region48: #{tpu_custom_call.1} parent=1 // pred_region
      %s541 = ssub.s32 128, 128
      %542 = vsyncadd [#allocation4], %s541
      %s544 = sshll.u32 [#allocation11], 4
      %s545 = int_to_ptr.vmem [resolvable:$true] %s544
      %547 = dma.vmem_to_hbm [thread:$0]  %s545, 128, %s6, [#allocation4]
    $region49: #{tpu_custom_call.1} parent=1 // pred_fallthru
      _
    // Predicated region
    $region50: #{tpu_custom_call.1} parent=1 // pred_check
      _
    $region51: #{tpu_custom_call.1} parent=1 // pred_check_branch
      %549 = sbr.rel (0) target = $region53
    $region52: #{tpu_custom_call.1} parent=1 // pred_region
      %s551 = ssub.s32 128, 128
      %552 = vsyncadd [#allocation13], %s551
      %s554 = sshll.u32 [#allocation12], 4
      %s555 = int_to_ptr.vmem [resolvable:$true] %s554
      %557 = dma.vmem_to_hbm [thread:$0]  %s555, 128, %s7, [#allocation13]
    $region53: #{tpu_custom_call.1} parent=1 // pred_fallthru
      _
    // Predicated region
    $region54: #{tpu_custom_call.1} parent=1 // pred_check
      _
    $region55: #{tpu_custom_call.1} parent=1 // pred_check_branch
      %559 = sbr.rel (0) target = $region57
    $region56: #{tpu_custom_call.1} parent=1 // pred_region
      %560 = dma.done [#allocation4], 128
    $region57: #{tpu_custom_call.1} parent=1 // pred_fallthru
      _
    // Predicated region
    $region58: #{tpu_custom_call.1} parent=1 // pred_check
      _
    $region59: #{tpu_custom_call.1} parent=1 // pred_check_branch
      %562 = sbr.rel (0) target = $region61
    $region60: #{tpu_custom_call.1} parent=1 // pred_region
      %563 = dma.done [#allocation13], 128
    $region61: #{tpu_custom_call.1} parent=1 // pred_fallthru
      _
    %564 = vsyncpa [#allocation3], 1
    %565 = vsyncpa [#allocation6], 1
    %566 = vsyncpa [#allocation9], 1
    %567 = vsyncpa [#allocation4], 1
    %568 = vsyncpa [#allocation13], 1

</llo_original>
